<compile_context>
chip_gen: v7x
topology: tpu7x:2x2x1
jax: 0.10.0
libtpu: 0.0.40
codegen_flags: <defaults>
</compile_context>

<pallas_src>
import functools

import jax
import jax.numpy as jnp
import numpy as np
from jax.experimental import pallas as pl
from jax.experimental.pallas import tpu as pltpu

_NEG_INF = -1e30  # big finite negative: avoids inf-inf NaNs in the online softmax


# ------------------- shared streaming-softmax / pooling tail ------------------
def _online_softmax_pool(att, v, t_tile, T_valid, o_ref, m_ref, l_ref, acc_ref):
    """Online softmax over time + attentive pooling.

    att : (H, tT) f32 head-major attention logits for this time tile
    v   : (tT, C) f32 compressed values for this time tile
    """
    t_idx = pl.program_id(1)

    # init running stats on the first time tile of each batch element
    @pl.when(t_idx == 0)
    def _():
        m_ref[...] = jnp.full_like(m_ref, _NEG_INF)
        l_ref[...] = jnp.zeros_like(l_ref)
        acc_ref[...] = jnp.zeros_like(acc_ref)

    # mask padded time frames (T was zero-padded up to a multiple of tT)
    t0 = t_idx * t_tile
    tids = t0 + jax.lax.broadcasted_iota(jnp.int32, (1, t_tile), 1)
    att = jnp.where(tids < T_valid, att, _NEG_INF)

    # online softmax update: lane-axis (time) reductions, head-major layout
    m_prev = m_ref[...]                                               # (H, 1)
    m_new = jnp.maximum(m_prev, jnp.max(att, axis=1, keepdims=True))  # (H, 1)
    alpha = jnp.exp(m_prev - m_new)                                   # (H, 1)
    p = jnp.exp(att - m_new)                                          # (H, tT)
    l_ref[...] = alpha * l_ref[...] + jnp.sum(p, axis=1, keepdims=True)
    acc_ref[...] = alpha * acc_ref[...] + jnp.dot(
        p, v, preferred_element_type=jnp.float32)                     # (H, C)
    m_ref[...] = m_new

    # finalize on the last time tile
    @pl.when(t_idx == pl.num_programs(1) - 1)
    def _():
        inv_l = pl.reciprocal(l_ref[...], approx=True)   # EUP slot, ~free
        o_ref[...] = (acc_ref[...] * inv_l).astype(o_ref.dtype)


# ----------------- kernel, default path (VPU layer sum, all gens) -------------
def _mhfa_pool_kernel(wk_ref, wv_ref,          # SMEM: softmaxed layer weights (L,)
                      x_ref,                   # VMEM: (L, tT, D) bf16/f32 block
                      Wk_ref, bk_ref,          # (D, C), (1, C)  f32
                      Wv_ref, bv_ref,          # (D, C), (1, C)  f32
                      Wa_ref, ba_ref,          # (H, C), (H, 1)  f32
                      o_ref,                   # (H, C) pooled output
                      m_ref, l_ref, acc_ref,   # scratch: (H,1), (H,1), (H,C)
                      *, T_valid):
    L, tT, D = x_ref.shape

    # layer-weighted sums over the L hidden layers (VPU path; each bf16 chunk
    # is upcast to f32 before the multiply-accumulate -> works on v5e too).
    x0 = x_ref[0].astype(jnp.float32)
    k_td = wk_ref[0] * x0
    v_td = wv_ref[0] * x0
    for l in range(1, L):
        xl = x_ref[l].astype(jnp.float32)
        k_td = k_td + wk_ref[l] * xl
        v_td = v_td + wv_ref[l] * xl

    # K / V compression linears (MXU, f32 accumulation)
    k = jnp.dot(k_td, Wk_ref[...], preferred_element_type=jnp.float32) + bk_ref[...]
    v = jnp.dot(v_td, Wv_ref[...], preferred_element_type=jnp.float32) + bv_ref[...]

    # head-major attention logits: att[h, t] = sum_c Wa[h, c] * k[t, c]
    att = jax.lax.dot_general(Wa_ref[...], k, (((1,), (1,)), ((), ())),
                              preferred_element_type=jnp.float32) + ba_ref[...]

    _online_softmax_pool(att, v, tT, T_valid, o_ref, m_ref, l_ref, acc_ref)


# -------- kernel, folded path (layer mix + att head on the MXU, v6e/v7x) ------
def _mhfa_pool_fold_kernel(x_ref,              # VMEM: (tT, L*D) bf16 block
                           Wv_ref, bv_ref,     # (L*D, C) bf16, (1, C) f32
                           Wa_ref, ba_ref,     # (H, L*D) bf16, (H, 1) f32
                           o_ref,
                           m_ref, l_ref, acc_ref,
                           *, T_valid):
    tT = x_ref.shape[0]
    x = x_ref[...]
    # layer mix + V compression fused into one bf16 MXU matmul (N = C)
    v = jnp.dot(x, Wv_ref[...], preferred_element_type=jnp.float32) + bv_ref[...]
    # layer mix + K compression + attention head folded into one head-major
    # bf16 matmul: att[h, t] = sum_{ld} Wa_big[h, ld] * x[t, ld]  (k never built)
    att = jax.lax.dot_general(Wa_ref[...], x, (((1,), (1,)), ((), ())),
                              preferred_element_type=jnp.float32) + ba_ref[...]
    _online_softmax_pool(att, v, tT, T_valid, o_ref, m_ref, l_ref, acc_ref)


# --------------------------------- wrapper -------------------------------------
def _sublane_multiple(dtype):
    return {1: 32, 2: 16, 4: 8}[jnp.dtype(dtype).itemsize]


def mhfa_forward(x, params, *, time_tile=None, fold_layer_mix=False,
                 x_dtype=jnp.bfloat16):
    """x: (B, L, T, D) float32 stacked hidden states; returns logits (B, NC)."""
    B, L, T, D = x.shape
    C = params["Wk"].shape[0]      # compression_dim
    H = params["Wa"].shape[0]      # head_nb
    itemsize = jnp.dtype(x_dtype).itemsize

    # -------- time tiling (bounds VMEM regardless of T) ------------------------
    sub = _sublane_multiple(x_dtype)
    if time_tile is None:
        # largest tile whose double-buffered x block stays under ~24 MiB
        # (v7x-safe); v5e/v6e (128 MiB VMEM) can use bigger tiles if desired.
        budget = 24 * 1024 * 1024
        time_tile = max(sub, (budget // (2 * L * D * itemsize)) // sub * sub)
    tT = min(int(time_tile), max(T, sub))
    tT = ((tT + sub - 1) // sub) * sub        # sublane-packing-aligned tile
    nT = pl.cdiv(T, tT)
    T_pad = nT * tT

    # -------- glue math done once in XLA (never per grid step) ----------------
    wk_sm = jax.nn.softmax(params["weights_k"]).astype(jnp.float32)
    wv_sm = jax.nn.softmax(params["weights_v"]).astype(jnp.float32)
    Wa = params["Wa"].astype(jnp.float32)                 # (H, C)  head-major
    ba = params["ba"].reshape(H, 1).astype(jnp.float32)

    vmem_full = pl.BlockSpec(memory_space=pltpu.MemorySpace.VMEM)
    smem_full = pl.BlockSpec(memory_space=pltpu.MemorySpace.SMEM)

    if fold_layer_mix:
        # Fold softmaxed layer weights into the compression matrices, and fold
        # the attention head through the K path: per tile the kernel runs just
        # two bf16 MXU matmuls, (tT,L*D)x(L*D,C) for V and (H,L*D)x(L*D,tT)
        # for the head-major logits.  Recommended on v6e/v7x (bf16 MXU + wide
        # VALU); keep fold_layer_mix=False on v5e.
        # NOTE: in production the backbone would emit the (B, T, L*D) layout
        # directly; the transpose below is just test glue.
        x_k = jnp.transpose(x, (0, 2, 1, 3)).reshape(B, T, L * D)
        x_k = jnp.pad(x_k, ((0, 0), (0, T_pad - T), (0, 0))).astype(x_dtype)

        Wk_big = (wk_sm[:, None, None] * params["Wk"].T[None]).reshape(L * D, C)
        Wv_big = (wv_sm[:, None, None] * params["Wv"].T[None]).reshape(L * D, C)
        Wa_big = (Wa @ Wk_big.T).astype(x_dtype)                     # (H, L*D)
        b_att = (Wa @ params["bk"].astype(jnp.float32)
                 ).reshape(H, 1) + ba                                # (H, 1) f32
        Wv_big = Wv_big.astype(x_dtype)
        bv = params["bv"].reshape(1, C).astype(jnp.float32)

        kernel = functools.partial(_mhfa_pool_fold_kernel, T_valid=T)
        in_specs = [
            pl.BlockSpec((None, tT, L * D), lambda b, t: (b, t, 0)),   # x
            vmem_full, vmem_full,                                      # Wv_big, bv
            vmem_full, vmem_full,                                      # Wa_big, b_att
        ]
        operands = (x_k, Wv_big, bv, Wa_big, b_att)
        x_block_bytes = tT * L * D * itemsize
        const_bytes = (Wv_big.size + Wa_big.size) * itemsize + 4 * (C + H)
    else:
        x_k = jnp.pad(x, ((0, 0), (0, 0), (0, T_pad - T), (0, 0))).astype(x_dtype)
        WkT = params["Wk"].T.astype(jnp.float32)
        WvT = params["Wv"].T.astype(jnp.float32)
        bk = params["bk"].reshape(1, C).astype(jnp.float32)
        bv = params["bv"].reshape(1, C).astype(jnp.float32)

        kernel = functools.partial(_mhfa_pool_kernel, T_valid=T)
        in_specs = [
            smem_full, smem_full,                                       # wk, wv
            pl.BlockSpec((None, L, tT, D), lambda b, t: (b, 0, t, 0)),  # x
            vmem_full, vmem_full,                                       # Wk, bk
            vmem_full, vmem_full,                                       # Wv, bv
            vmem_full, vmem_full,                                       # Wa, ba
        ]
        operands = (wk_sm, wv_sm, x_k, WkT, bk, WvT, bv, Wa, ba)
        x_block_bytes = L * tT * D * itemsize
        const_bytes = 4 * (2 * D * C + 2 * C + H * C + H)

    # explicit scoped-VMEM budget: double-buffered x block + resident weights
    # + scratch/output + slack (keeps us honest on v7x's 64 MiB VMEM).
    vmem_limit = int(2 * x_block_bytes + const_bytes
                     + 4 * (2 * H * C + 2 * H) + (4 << 20))

    pooled = pl.pallas_call(
        kernel,
        grid=(B, nT),
        in_specs=in_specs,
        out_specs=pl.BlockSpec((None, H, C), lambda b, t: (b, 0, 0)),
        out_shape=jax.ShapeDtypeStruct((B, H, C), jnp.float32),
        scratch_shapes=[
            pltpu.VMEM((H, 1), jnp.float32),    # running max
            pltpu.VMEM((H, 1), jnp.float32),    # running softmax denominator
            pltpu.VMEM((H, C), jnp.float32),    # pooled accumulator
        ],
        compiler_params=pltpu.CompilerParams(
            dimension_semantics=("parallel", "arbitrary"),
            vmem_limit_bytes=vmem_limit),
    )(*operands)

    # -------- pooling FC + AMSMLoss(label=None) as batched XLA matmuls --------
    flat = pooled.reshape(B, H * C)
    feat = flat @ params["Wfc"].T.astype(jnp.float32) + params["bfc"]    # (B, O)
    xn = feat * jax.lax.rsqrt(
        jnp.maximum(jnp.sum(feat * feat, axis=1, keepdims=True), 1e-24))
    w = params["Wcls"].astype(jnp.float32)
    wn = w * jax.lax.rsqrt(
        jnp.maximum(jnp.sum(w * w, axis=1, keepdims=True), 1e-24))
    return xn @ wn.T                                                     # (B, NC)


# ---------------------------- pure-JAX reference -------------------------------
def mhfa_reference(x, params):
    B = x.shape[0]
    wk = jax.nn.softmax(params["weights_k"])
    wv = jax.nn.softmax(params["weights_v"])
    k = jnp.einsum("bltd,l->btd", x, wk)
    v = jnp.einsum("bltd,l->btd", x, wv)
    k = k @ params["Wk"].T + params["bk"]
    v = v @ params["Wv"].T + params["bv"]
    att = k @ params["Wa"].T + params["ba"]                       # (B, T, H)
    a = jax.nn.softmax(att, axis=1)
    pooled = jnp.einsum("bth,btc->bhc", a, v)                     # (B, H, C)
    flat = pooled.reshape(B, -1)
    out = flat @ params["Wfc"].T + params["bfc"]                  # (B, O)
    xn = out / jnp.maximum(jnp.linalg.norm(out, axis=1, keepdims=True), 1e-12)
    w = params["Wcls"]
    wn = w / jnp.maximum(jnp.linalg.norm(w, axis=1, keepdims=True), 1e-12)
    return xn @ wn.T


# ------------------------------------ main --------------------------------------
if __name__ == "__main__":
    # small config consistent with MHFATop / AMSMLoss hyperparameters
    # (C kept at 128 so attention / pooling lanes are dense, as in real WavLM)
    B, L, T, D = 2, 4, 28, 64      # batch, number_layers, frames, inputs_dim
    C, H, O, NC = 128, 4, 16, 2    # compression_dim, head_nb, outputs_dim, classes
    TIME_TILE = 16                 # 2 time tiles -> exercises online softmax + pad mask

    key = jax.random.PRNGKey(0)
    ks = jax.random.split(key, 9)
    params = {
        "weights_k": jnp.ones((L,), jnp.float32),   # nn.Parameter(torch.ones(L))
        "weights_v": jnp.ones((L,), jnp.float32),
        "Wk": 0.1 * jax.random.normal(ks[0], (C, D), jnp.float32),
        "bk": 0.1 * jax.random.normal(ks[1], (C,), jnp.float32),
        "Wv": 0.1 * jax.random.normal(ks[2], (C, D), jnp.float32),
        "bv": 0.1 * jax.random.normal(ks[3], (C,), jnp.float32),
        "Wa": 0.1 * jax.random.normal(ks[4], (H, C), jnp.float32),
        "ba": 0.05 * jax.random.normal(ks[5], (H,), jnp.float32),
        "Wfc": 0.1 * jax.random.normal(ks[6], (O, H * C), jnp.float32),
        "bfc": jnp.zeros((O,), jnp.float32),
        "Wcls": 0.2 * jax.random.normal(ks[7], (NC, O), jnp.float32),
    }
    x = jax.random.normal(ks[8], (B, L, T, D), jnp.float32)

    # both the kernel and the reference see the same bf16-quantized activations
    x_q = x.astype(jnp.bfloat16).astype(jnp.float32)
    ref = jax.block_until_ready(mhfa_reference(x_q, params))

    # default path: VPU layer-weighted sum (safe on v5e / v6e / v7x)
    out_vpu = jax.block_until_ready(
        mhfa_forward(x, params, time_tile=TIME_TILE, fold_layer_mix=False))
    np.testing.assert_allclose(np.asarray(out_vpu), np.asarray(ref),
                               rtol=1e-2, atol=1e-2)

    # folded path: layer mix + K compression + att head fused into bf16 MXU matmuls
    out_mxu = jax.block_until_ready(
        mhfa_forward(x, params, time_tile=TIME_TILE, fold_layer_mix=True))
    np.testing.assert_allclose(np.asarray(out_mxu), np.asarray(ref),
                               rtol=3e-2, atol=3e-2)

    assert out_vpu.shape == (B, NC) and out_mxu.shape == (B, NC)
    print("KERNEL_OK")
</pallas_src>

<mosaic_0001>
module attributes {stable_mosaic.version = 11 : i64} {
  func.func @_mhfa_pool_kernel(%arg0: i32, %arg1: i32, %arg2: memref<4xf32, #tpu.memory_space<smem>>, %arg3: memref<4xf32, #tpu.memory_space<smem>>, %arg4: memref<1x4x16x64xbf16, #tpu.memory_space<vmem>>, %arg5: memref<64x128xf32, #tpu.memory_space<vmem>>, %arg6: memref<1x128xf32, #tpu.memory_space<vmem>>, %arg7: memref<64x128xf32, #tpu.memory_space<vmem>>, %arg8: memref<1x128xf32, #tpu.memory_space<vmem>>, %arg9: memref<4x128xf32, #tpu.memory_space<vmem>>, %arg10: memref<4x1xf32, #tpu.memory_space<vmem>>, %arg11: memref<1x4x128xf32, #tpu.memory_space<vmem>>, %arg12: memref<4x1xf32, #tpu.memory_space<vmem>>, %arg13: memref<4x1xf32, #tpu.memory_space<vmem>>, %arg14: memref<4x128xf32, #tpu.memory_space<vmem>>) attributes {dimension_semantics = [#tpu.dimension_semantics<parallel>, #tpu.dimension_semantics<arbitrary>], iteration_bounds = array<i64: 2, 2>, scalar_prefetch = 0 : i64, scratch_operands = 3 : i64, tpu.core_type = #tpu.core_type<tc>, window_params = [{transform_indices = @transform_0, window_bounds = array<i64: 4>}, {transform_indices = @transform_1, window_bounds = array<i64: 4>}, {transform_indices = @transform_2, window_bounds = array<i64: 1, 4, 16, 64>}, {pipeline_mode = #tpu.pipeline_mode<synchronous>, transform_indices = @transform_3, window_bounds = array<i64: 64, 128>}, {pipeline_mode = #tpu.pipeline_mode<synchronous>, transform_indices = @transform_4, window_bounds = array<i64: 1, 128>}, {pipeline_mode = #tpu.pipeline_mode<synchronous>, transform_indices = @transform_5, window_bounds = array<i64: 64, 128>}, {pipeline_mode = #tpu.pipeline_mode<synchronous>, transform_indices = @transform_6, window_bounds = array<i64: 1, 128>}, {pipeline_mode = #tpu.pipeline_mode<synchronous>, transform_indices = @transform_7, window_bounds = array<i64: 4, 128>}, {pipeline_mode = #tpu.pipeline_mode<synchronous>, transform_indices = @transform_8, window_bounds = array<i64: 4, 1>}, {transform_indices = @transform_9, window_bounds = array<i64: 1, 4, 128>}]} {
    %c0 = arith.constant 0 : index
    %c0_0 = arith.constant 0 : index
    %c0_1 = arith.constant 0 : index
    %c0_2 = arith.constant 0 : index
    %0 = vector.load %arg4[%c0, %c0_0, %c0_1, %c0_2] : memref<1x4x16x64xbf16, #tpu.memory_space<vmem>>, vector<1x1x16x64xbf16>
    %1 = vector.shape_cast %0 : vector<1x1x16x64xbf16> to vector<16x64xbf16>
    %2 = arith.extf %1 : vector<16x64xbf16> to vector<16x64xf32>
    %c0_3 = arith.constant 0 : index
    %3 = memref.load %arg2[%c0_3] : memref<4xf32, #tpu.memory_space<smem>>
    %4 = vector.broadcast %3 : f32 to vector<16x64xf32>
    %5 = arith.mulf %4, %2 : vector<16x64xf32>
    %c0_4 = arith.constant 0 : index
    %6 = memref.load %arg3[%c0_4] : memref<4xf32, #tpu.memory_space<smem>>
    %7 = vector.broadcast %6 : f32 to vector<16x64xf32>
    %8 = arith.mulf %7, %2 : vector<16x64xf32>
    %c0_5 = arith.constant 0 : index
    %c1 = arith.constant 1 : index
    %c0_6 = arith.constant 0 : index
    %c0_7 = arith.constant 0 : index
    %9 = vector.load %arg4[%c0_5, %c1, %c0_6, %c0_7] : memref<1x4x16x64xbf16, #tpu.memory_space<vmem>>, vector<1x1x16x64xbf16>
    %10 = vector.shape_cast %9 : vector<1x1x16x64xbf16> to vector<16x64xbf16>
    %11 = arith.extf %10 : vector<16x64xbf16> to vector<16x64xf32>
    %c1_8 = arith.constant 1 : index
    %12 = memref.load %arg2[%c1_8] : memref<4xf32, #tpu.memory_space<smem>>
    %13 = vector.broadcast %12 : f32 to vector<16x64xf32>
    %14 = arith.mulf %13, %11 : vector<16x64xf32>
    %15 = arith.addf %5, %14 : vector<16x64xf32>
    %c1_9 = arith.constant 1 : index
    %16 = memref.load %arg3[%c1_9] : memref<4xf32, #tpu.memory_space<smem>>
    %17 = vector.broadcast %16 : f32 to vector<16x64xf32>
    %18 = arith.mulf %17, %11 : vector<16x64xf32>
    %19 = arith.addf %8, %18 : vector<16x64xf32>
    %c0_10 = arith.constant 0 : index
    %c2 = arith.constant 2 : index
    %c0_11 = arith.constant 0 : index
    %c0_12 = arith.constant 0 : index
    %20 = vector.load %arg4[%c0_10, %c2, %c0_11, %c0_12] : memref<1x4x16x64xbf16, #tpu.memory_space<vmem>>, vector<1x1x16x64xbf16>
    %21 = vector.shape_cast %20 : vector<1x1x16x64xbf16> to vector<16x64xbf16>
    %22 = arith.extf %21 : vector<16x64xbf16> to vector<16x64xf32>
    %c2_13 = arith.constant 2 : index
    %23 = memref.load %arg2[%c2_13] : memref<4xf32, #tpu.memory_space<smem>>
    %24 = vector.broadcast %23 : f32 to vector<16x64xf32>
    %25 = arith.mulf %24, %22 : vector<16x64xf32>
    %26 = arith.addf %15, %25 : vector<16x64xf32>
    %c2_14 = arith.constant 2 : index
    %27 = memref.load %arg3[%c2_14] : memref<4xf32, #tpu.memory_space<smem>>
    %28 = vector.broadcast %27 : f32 to vector<16x64xf32>
    %29 = arith.mulf %28, %22 : vector<16x64xf32>
    %30 = arith.addf %19, %29 : vector<16x64xf32>
    %c0_15 = arith.constant 0 : index
    %c3 = arith.constant 3 : index
    %c0_16 = arith.constant 0 : index
    %c0_17 = arith.constant 0 : index
    %31 = vector.load %arg4[%c0_15, %c3, %c0_16, %c0_17] : memref<1x4x16x64xbf16, #tpu.memory_space<vmem>>, vector<1x1x16x64xbf16>
    %32 = vector.shape_cast %31 : vector<1x1x16x64xbf16> to vector<16x64xbf16>
    %33 = arith.extf %32 : vector<16x64xbf16> to vector<16x64xf32>
    %c3_18 = arith.constant 3 : index
    %34 = memref.load %arg2[%c3_18] : memref<4xf32, #tpu.memory_space<smem>>
    %35 = vector.broadcast %34 : f32 to vector<16x64xf32>
    %36 = arith.mulf %35, %33 : vector<16x64xf32>
    %37 = arith.addf %26, %36 : vector<16x64xf32>
    %c3_19 = arith.constant 3 : index
    %38 = memref.load %arg3[%c3_19] : memref<4xf32, #tpu.memory_space<smem>>
    %39 = vector.broadcast %38 : f32 to vector<16x64xf32>
    %40 = arith.mulf %39, %33 : vector<16x64xf32>
    %41 = arith.addf %30, %40 : vector<16x64xf32>
    %c0_20 = arith.constant 0 : index
    %c0_21 = arith.constant 0 : index
    %42 = vector.load %arg5[%c0_20, %c0_21] : memref<64x128xf32, #tpu.memory_space<vmem>>, vector<64x128xf32>
    %cst = arith.constant dense<0.000000e+00> : vector<16x128xf32>
    %43 = tpu.matmul %37, %42, %cst {dimension_numbers = #tpu.dot_dimension_numbers<[1], [0], [0], [1], [0, 0, 1, 1], [], []>} : vector<16x64xf32>, vector<64x128xf32>, vector<16x128xf32> -> vector<16x128xf32>
    %c0_22 = arith.constant 0 : index
    %c0_23 = arith.constant 0 : index
    %44 = vector.load %arg6[%c0_22, %c0_23] : memref<1x128xf32, #tpu.memory_space<vmem>>, vector<1x128xf32>
    %45 = vector.broadcast %44 : vector<1x128xf32> to vector<16x128xf32>
    %46 = arith.addf %43, %45 : vector<16x128xf32>
    %c0_24 = arith.constant 0 : index
    %c0_25 = arith.constant 0 : index
    %47 = vector.load %arg7[%c0_24, %c0_25] : memref<64x128xf32, #tpu.memory_space<vmem>>, vector<64x128xf32>
    %cst_26 = arith.constant dense<0.000000e+00> : vector<16x128xf32>
    %48 = tpu.matmul %41, %47, %cst_26 {dimension_numbers = #tpu.dot_dimension_numbers<[1], [0], [0], [1], [0, 0, 1, 1], [], []>} : vector<16x64xf32>, vector<64x128xf32>, vector<16x128xf32> -> vector<16x128xf32>
    %c0_27 = arith.constant 0 : index
    %c0_28 = arith.constant 0 : index
    %49 = vector.load %arg8[%c0_27, %c0_28] : memref<1x128xf32, #tpu.memory_space<vmem>>, vector<1x128xf32>
    %50 = vector.broadcast %49 : vector<1x128xf32> to vector<16x128xf32>
    %51 = arith.addf %48, %50 : vector<16x128xf32>
    %c0_29 = arith.constant 0 : index
    %c0_30 = arith.constant 0 : index
    %52 = vector.load %arg9[%c0_29, %c0_30] : memref<4x128xf32, #tpu.memory_space<vmem>>, vector<4x128xf32>
    %cst_31 = arith.constant dense<0.000000e+00> : vector<4x16xf32>
    %53 = tpu.matmul %52, %46, %cst_31 {dimension_numbers = #tpu.dot_dimension_numbers<[1], [1], [0], [0], [0, 0, 1, 0], [], []>} : vector<4x128xf32>, vector<16x128xf32>, vector<4x16xf32> -> vector<4x16xf32>
    %c0_32 = arith.constant 0 : index
    %c0_33 = arith.constant 0 : index
    %54 = vector.load %arg10[%c0_32, %c0_33] : memref<4x1xf32, #tpu.memory_space<vmem>>, vector<4x1xf32>
    %55 = vector.broadcast %54 : vector<4x1xf32> to vector<4x16xf32>
    %56 = arith.addf %53, %55 : vector<4x16xf32>
    %c0_i32 = arith.constant 0 : i32
    %57 = arith.cmpi eq, %arg1, %c0_i32 : i32
    %58 = arith.extui %57 : i1 to i32
    %c0_i32_34 = arith.constant 0 : i32
    %59 = arith.cmpi ne, %58, %c0_i32_34 : i32
    scf.if %59 {
      %cst_52 = arith.constant -1.000000e+30 : f32
      %95 = vector.broadcast %cst_52 : f32 to vector<4x1xf32>
      %c0_53 = arith.constant 0 : index
      %c0_54 = arith.constant 0 : index
      %96 = vector.load %arg12[%c0_53, %c0_54] : memref<4x1xf32, #tpu.memory_space<vmem>>, vector<4x1xf32>
      tpu.vector_store %arg12[%c0_53, %c0_54], %95 {strides = array<i32>} : memref<4x1xf32, #tpu.memory_space<vmem>>, vector<4x1xf32>,
      %cst_55 = arith.constant 0.000000e+00 : f32
      %97 = vector.broadcast %cst_55 : f32 to vector<4x1xf32>
      %c0_56 = arith.constant 0 : index
      %c0_57 = arith.constant 0 : index
      %98 = vector.load %arg13[%c0_56, %c0_57] : memref<4x1xf32, #tpu.memory_space<vmem>>, vector<4x1xf32>
      tpu.vector_store %arg13[%c0_56, %c0_57], %97 {strides = array<i32>} : memref<4x1xf32, #tpu.memory_space<vmem>>, vector<4x1xf32>,
      %cst_58 = arith.constant 0.000000e+00 : f32
      %99 = vector.broadcast %cst_58 : f32 to vector<4x128xf32>
      %c0_59 = arith.constant 0 : index
      %c0_60 = arith.constant 0 : index
      %100 = vector.load %arg14[%c0_59, %c0_60] : memref<4x128xf32, #tpu.memory_space<vmem>>, vector<4x128xf32>
      tpu.vector_store %arg14[%c0_59, %c0_60], %99 {strides = array<i32>} : memref<4x128xf32, #tpu.memory_space<vmem>>, vector<4x128xf32>,
    } else {
    }
    %c16_i32 = arith.constant 16 : i32
    %60 = arith.muli %arg1, %c16_i32 : i32
    %61 = tpu.iota {dimensions = array<i32: 1>} : vector<1x16xi32>
    %62 = vector.broadcast %60 : i32 to vector<1x16xi32>
    %63 = arith.addi %62, %61 : vector<1x16xi32>
    %c28_i32 = arith.constant 28 : i32
    %64 = vector.broadcast %c28_i32 : i32 to vector<1x16xi32>
    %65 = arith.cmpi slt, %63, %64 : vector<1x16xi32>
    %cst_35 = arith.constant -1.000000e+30 : f32
    %66 = vector.shape_cast %65 : vector<1x16xi1> to vector<1x16xi1>
    %67 = vector.broadcast %66 : vector<1x16xi1> to vector<4x16xi1>
    %68 = vector.broadcast %cst_35 : f32 to vector<4x16xf32>
    %69 = arith.select %67, %56, %68 : vector<4x16xi1>, vector<4x16xf32>
    %c0_36 = arith.constant 0 : index
    %c0_37 = arith.constant 0 : index
    %70 = vector.load %arg12[%c0_36, %c0_37] : memref<4x1xf32, #tpu.memory_space<vmem>>, vector<4x1xf32>
    %cst_38 = arith.constant dense<0xFF800000> : vector<4xf32>
    %71 = vector.multi_reduction <maximumf>, %69, %cst_38 [1] : vector<4x16xf32> to vector<4xf32>
    %72 = vector.shape_cast %71 : vector<4xf32> to vector<4x1xf32>
    %73 = arith.maximumf %70, %72 : vector<4x1xf32>
    %74 = arith.subf %70, %73 : vector<4x1xf32>
    %75 = math.exp %74 : vector<4x1xf32>
    %76 = vector.broadcast %73 : vector<4x1xf32> to vector<4x16xf32>
    %77 = arith.subf %69, %76 : vector<4x16xf32>
    %78 = math.exp %77 : vector<4x16xf32>
    %c0_39 = arith.constant 0 : index
    %c0_40 = arith.constant 0 : index
    %79 = vector.load %arg13[%c0_39, %c0_40] : memref<4x1xf32, #tpu.memory_space<vmem>>, vector<4x1xf32>
    %80 = arith.mulf %75, %79 : vector<4x1xf32>
    %cst_41 = arith.constant dense<0.000000e+00> : vector<4xf32>
    %81 = vector.multi_reduction <add>, %78, %cst_41 [1] : vector<4x16xf32> to vector<4xf32>
    %82 = vector.shape_cast %81 : vector<4xf32> to vector<4x1xf32>
    %83 = arith.addf %80, %82 : vector<4x1xf32>
    %c0_42 = arith.constant 0 : index
    %c0_43 = arith.constant 0 : index
    %84 = vector.load %arg13[%c0_42, %c0_43] : memref<4x1xf32, #tpu.memory_space<vmem>>, vector<4x1xf32>
    tpu.vector_store %arg13[%c0_42, %c0_43], %83 {strides = array<i32>} : memref<4x1xf32, #tpu.memory_space<vmem>>, vector<4x1xf32>,
    %c0_44 = arith.constant 0 : index
    %c0_45 = arith.constant 0 : index
    %85 = vector.load %arg14[%c0_44, %c0_45] : memref<4x128xf32, #tpu.memory_space<vmem>>, vector<4x128xf32>
    %86 = vector.broadcast %75 : vector<4x1xf32> to vector<4x128xf32>
    %87 = arith.mulf %86, %85 : vector<4x128xf32>
    %cst_46 = arith.constant dense<0.000000e+00> : vector<4x128xf32>
    %88 = tpu.matmul %78, %51, %cst_46 {dimension_numbers = #tpu.dot_dimension_numbers<[1], [0], [0], [1], [0, 0, 1, 1], [], []>} : vector<4x16xf32>, vector<16x128xf32>, vector<4x128xf32> -> vector<4x128xf32>
    %89 = arith.addf %87, %88 : vector<4x128xf32>
    %c0_47 = arith.constant 0 : index
    %c0_48 = arith.constant 0 : index
    %90 = vector.load %arg14[%c0_47, %c0_48] : memref<4x128xf32, #tpu.memory_space<vmem>>, vector<4x128xf32>
    tpu.vector_store %arg14[%c0_47, %c0_48], %89 {strides = array<i32>} : memref<4x128xf32, #tpu.memory_space<vmem>>, vector<4x128xf32>,
    %c0_49 = arith.constant 0 : index
    %c0_50 = arith.constant 0 : index
    %91 = vector.load %arg12[%c0_49, %c0_50] : memref<4x1xf32, #tpu.memory_space<vmem>>, vector<4x1xf32>
    tpu.vector_store %arg12[%c0_49, %c0_50], %73 {strides = array<i32>} : memref<4x1xf32, #tpu.memory_space<vmem>>, vector<4x1xf32>,
    %c1_i32 = arith.constant 1 : i32
    %92 = arith.cmpi eq, %arg1, %c1_i32 : i32
    %93 = arith.extui %92 : i1 to i32
    %c0_i32_51 = arith.constant 0 : i32
    %94 = arith.cmpi ne, %93, %c0_i32_51 : i32
    scf.if %94 {
      %c0_52 = arith.constant 0 : index
      %c0_53 = arith.constant 0 : index
      %95 = vector.load %arg13[%c0_52, %c0_53] : memref<4x1xf32, #tpu.memory_space<vmem>>, vector<4x1xf32>
      %96 = tpu.reciprocal %95 {approx = true} : vector<4x1xf32> -> vector<4x1xf32>
      %c0_54 = arith.constant 0 : index
      %c0_55 = arith.constant 0 : index
      %97 = vector.load %arg14[%c0_54, %c0_55] : memref<4x128xf32, #tpu.memory_space<vmem>>, vector<4x128xf32>
      %98 = vector.broadcast %96 : vector<4x1xf32> to vector<4x128xf32>
      %99 = arith.mulf %97, %98 : vector<4x128xf32>
      %c0_56 = arith.constant 0 : index
      %c0_57 = arith.constant 0 : index
      %c0_58 = arith.constant 0 : index
      %100 = vector.load %arg11[%c0_56, %c0_57, %c0_58] : memref<1x4x128xf32, #tpu.memory_space<vmem>>, vector<1x4x128xf32>
      %101 = vector.shape_cast %100 : vector<1x4x128xf32> to vector<4x128xf32>
      %102 = vector.shape_cast %99 : vector<4x128xf32> to vector<1x4x128xf32>
      tpu.vector_store %arg11[%c0_56, %c0_57, %c0_58], %102 {strides = array<i32>} : memref<1x4x128xf32, #tpu.memory_space<vmem>>, vector<1x4x128xf32>,
    } else {
    }
    return
  }
  func.func @transform_0(%arg0: i32, %arg1: i32) -> i32 {
    %c0_i32 = arith.constant 0 : i32
    %c0_i32_0 = arith.constant 0 : i32
    return %c0_i32 : i32
  }
  func.func @transform_1(%arg0: i32, %arg1: i32) -> i32 {
    %c0_i32 = arith.constant 0 : i32
    %c0_i32_0 = arith.constant 0 : i32
    return %c0_i32 : i32
  }
  func.func @transform_2(%arg0: i32, %arg1: i32) -> (i32, i32, i32, i32) {
    %c0_i32 = arith.constant 0 : i32
    %c0_i32_0 = arith.constant 0 : i32
    %c0_i32_1 = arith.constant 0 : i32
    return %arg0, %c0_i32, %arg1, %c0_i32_0 : i32, i32, i32, i32
  }
  func.func @transform_3(%arg0: i32, %arg1: i32) -> (i32, i32) {
    %c0_i32 = arith.constant 0 : i32
    %c0_i32_0 = arith.constant 0 : i32
    %c0_i32_1 = arith.constant 0 : i32
    return %c0_i32, %c0_i32_0 : i32, i32
  }
  func.func @transform_4(%arg0: i32, %arg1: i32) -> (i32, i32) {
    %c0_i32 = arith.constant 0 : i32
    %c0_i32_0 = arith.constant 0 : i32
    %c0_i32_1 = arith.constant 0 : i32
    return %c0_i32, %c0_i32_0 : i32, i32
  }
  func.func @transform_5(%arg0: i32, %arg1: i32) -> (i32, i32) {
    %c0_i32 = arith.constant 0 : i32
    %c0_i32_0 = arith.constant 0 : i32
    %c0_i32_1 = arith.constant 0 : i32
    return %c0_i32, %c0_i32_0 : i32, i32
  }
  func.func @transform_6(%arg0: i32, %arg1: i32) -> (i32, i32) {
    %c0_i32 = arith.constant 0 : i32
    %c0_i32_0 = arith.constant 0 : i32
    %c0_i32_1 = arith.constant 0 : i32
    return %c0_i32, %c0_i32_0 : i32, i32
  }
  func.func @transform_7(%arg0: i32, %arg1: i32) -> (i32, i32) {
    %c0_i32 = arith.constant 0 : i32
    %c0_i32_0 = arith.constant 0 : i32
    %c0_i32_1 = arith.constant 0 : i32
    return %c0_i32, %c0_i32_0 : i32, i32
  }
  func.func @transform_8(%arg0: i32, %arg1: i32) -> (i32, i32) {
    %c0_i32 = arith.constant 0 : i32
    %c0_i32_0 = arith.constant 0 : i32
    %c0_i32_1 = arith.constant 0 : i32
    return %c0_i32, %c0_i32_0 : i32, i32
  }
  func.func @transform_9(%arg0: i32, %arg1: i32) -> (i32, i32, i32) {
    %c0_i32 = arith.constant 0 : i32
    %c0_i32_0 = arith.constant 0 : i32
    %c0_i32_1 = arith.constant 0 : i32
    return %arg0, %c0_i32, %c0_i32_0 : i32, i32, i32
  }
}

</mosaic_0001>

<llo_original>
// kernel: tpu_custom_call.1
$region0: #{tpu_custom_call.1}
  #allocation0 [shape = 'u32[]', space=smem, size = 0x4, offset = 0x4, fixed_abs, tag = 'smem constant byte address 0x4 - core index']
  #allocation1 [shape = 'u32[144,128]{1,0:T(1,128)}', space=vmem, size = 0x12000, scoped, tag = 'internal scratch']
  #allocation2 [shape = 'f32[4,1]{1,0:T(4,128)}', space=vmem, size = 0x800, scoped, tag = 'scratch operand']
  #allocation3 [shape = 'f32[4,1]{1,0:T(4,128)}', space=vmem, size = 0x800, scoped, tag = 'scratch operand']
  #allocation4 [shape = 'f32[4,128]{1,0:T(4,128)}', space=vmem, size = 0x800, scoped, tag = 'scratch operand']
  #allocation16 [shape = 's32[]', space=sflag, size = 0x4, offset = 0, fixed_abs, tag = 'sflag constant byte address 0x0 - dummy sync flag']
  %s0 = inlined_call_operand.vmem [shape: f32[4], index: 0, kind: input, shape index: {}]
  %s1 = inlined_call_operand.vmem [shape: f32[4], index: 1, kind: input, shape index: {}]
  %s2 = inlined_call_operand.hbm [shape: bf16[2,4,32,64], index: 2, kind: input, shape index: {}]
  %s3 = inlined_call_operand.hbm [shape: f32[64,128], index: 3, kind: input, shape index: {}]
  %s4 = inlined_call_operand.vmem [shape: f32[1,128], index: 4, kind: input, shape index: {}]
  %s5 = inlined_call_operand.hbm [shape: f32[64,128], index: 5, kind: input, shape index: {}]
  %s6 = inlined_call_operand.vmem [shape: f32[1,128], index: 6, kind: input, shape index: {}]
  %s7 = inlined_call_operand.vmem [shape: f32[4,128], index: 7, kind: input, shape index: {}]
  %s8 = inlined_call_operand.vmem [shape: f32[4,1], index: 8, kind: input, shape index: {}]
  %s9 = inlined_call_operand.hbm [shape: f32[2,4,128], index: 9, kind: output, shape index: {}]
  %s10 = sld [smem:[#allocation0]]
  $region97: #{tpu_custom_call.1} parent=0
    _
  %s12 = ssub.s32 1, %s10
  %s13 = scalar_select 0, %s12, %s10
  $region1: #{tpu_custom_call.1} parent=0
    #allocation5 [shape = 'u8[512]{0}', space=smem, size = 0x200, scoped, tag = 'input window, operand 0, single buffered']
    #allocation6 [shape = 's32[2]{0}', space=sflag, size = 0x8, scoped, tag = 'scoped memory for tpu_custom_call.1']
    #allocation7 [shape = 's32[2]{0}', space=sflag, size = 0x8, scoped, tag = 'scoped memory for tpu_custom_call.1']
    #allocation8 [shape = 's32[2]{0}', space=sflag, size = 0x8, scoped, tag = 'scoped memory for tpu_custom_call.1']
    #allocation9 [shape = 'u8[512]{0}', space=smem, size = 0x200, scoped, tag = 'input window, operand 1, single buffered']
    #allocation10 [shape = 's32[1]{0}', space=sflag, size = 0x4, scoped, tag = 'scoped memory for tpu_custom_call.1']
    #allocation11 [shape = 'u8[32768]{0}', space=vmem, size = 0x8000, scoped, tag = 'input window, operand 2']
    #allocation12 [shape = 'u8[32768]{0}', space=vmem, size = 0x8000, scoped, tag = 'input window, operand 3, single buffered']
    #allocation13 [shape = 's32[1]{0}', space=sflag, size = 0x4, scoped, tag = 'scoped memory for tpu_custom_call.1']
    #allocation14 [shape = 'u8[32768]{0}', space=vmem, size = 0x8000, scoped, tag = 'input window, operand 5, single buffered']
    #allocation15 [shape = 'u8[4096]{0}', space=vmem, size = 0x1000, scoped, tag = 'output window, operand 0']
    %14 = vsyncpa [#allocation8], 0
    %15 = vsyncpa [#allocation10], 0
    %16 = vsyncpa [#allocation6], 0
    %s17 = scalar_lea.sflag [#allocation6], 1
    %18 = vsyncpa %s17, 0
    %19 = vsyncpa [#allocation13], 0
    %20 = vsyncpa [#allocation7], 0
    %s21 = scalar_lea.sflag [#allocation7], 1
    %22 = vsyncpa %s21, 0
    loop: start=0, step=1, limit=6
    $region2: #{tpu_custom_call.1} parent=1 // loop_pre_header
      _
    $region3: #{tpu_custom_call.1} parent=1 // loop_header
      %s24 = sphi 0, %s28
      %p25 = scmp.ge.s32.totalorder %s24, 6
      %s31 = sphi 0, %s43
      %s32 = sphi 0, %s39
      %s33 = sphi 0, %s31
      %s34 = sphi 0, %s32
      %s35 = sphi 0, %s33
      %s36 = sphi 0, %s34
      %s44 = sphi 0, %s44
      %s46 = sphi 0, %s44
      %s47 = sphi 0, %s46
      %s61 = sphi 0, %s47
      %s65 = sphi 0, %s65
      %s67 = sphi 0, %s65
      %s68 = sphi 0, %s67
      %s82 = sphi 0, %s68
      %s90 = sphi 0, %s92
      %s93 = sphi 0, %s90
      %s94 = sphi 0, %s93
      %s110 = sphi 0, %s94
      %s114 = sphi 0, %s114
      %s116 = sphi 0, %s114
      %s117 = sphi 0, %s116
      %s131 = sphi 0, %s117
      %s135 = sphi 0, %s135
      %s137 = sphi 0, %s135
      %s138 = sphi 0, %s137
      %s152 = sphi 0, %s138
      %s156 = sphi 0, %s156
      %s158 = sphi 0, %s156
      %s159 = sphi 0, %s158
      %s173 = sphi 0, %s159
      %s177 = sphi 0, %s177
      %s179 = sphi 0, %s177
      %s180 = sphi 0, %s179
      %s194 = sphi 0, %s180
      %s198 = sphi 0, %s198
      %s200 = sphi 0, %s198
      %s201 = sphi 0, %s200
      %s215 = sphi 0, %s201
      %s219 = sphi 0, %s219
      %s221 = sphi 0, %s219
      %s222 = sphi 0, %s221
      %s236 = sphi 0, %s222
      %s242 = sphi 0, %s244
      %s245 = sphi 0, %s242
      %s246 = sphi 0, %s245
      %s262 = sphi 0, %s246
    $region4: #{tpu_custom_call.1} parent=1 // loop_header_branch
      %27 = sbr.rel (%p25) target = $region8
    $region5: #{tpu_custom_call.1} parent=1 // loop_body
      %s29 = ssub.s32 %s24, 1
      %s30 = ssub.s32 %s24, 2
      %s37 = sadd.s32 1, %s32
      %p38 = scmp.ge.s32.totalorder %s37, 2
      %s39 = scalar_select %p38, 0, %s37
      %s40 = sadd.s32 1, %s31
      %s41 = scalar_select %p38, %s40, %s31
      %p42 = scmp.ge.s32.totalorder %s41, 2
      %s43 = scalar_select %p42, 0, %s41
      %s45 = sadd.s32 %s44, 1
      %p48 = scmp.eq.s32.totalorder %s24, 3
      %p49 = scmp.ne.s32.totalorder %s44, %s46
      %p50 = scmp.eq.s32.totalorder %s24, 0
      %p51 = por %p49, %p50
      %p52 = scmp.ne.s32.totalorder %s44, %s46
      %p53 = scmp.eq.s32.totalorder %s29, 3
      %p54 = por %p52, %p53
      %p55 = scmp.ne.s32.totalorder %s46, %s47
      %p56 = scmp.eq.s32.totalorder %s29, 0
      %p57 = por %p55, %p56
      %p58 = scmp.ne.s32.totalorder %s46, %s47
      %p59 = scmp.eq.s32.totalorder %s30, 3
      %p60 = por %p58, %p59
      %p62 = scmp.ne.s32.totalorder %s47, %s61
      %p63 = scmp.eq.s32.totalorder %s30, 0
      %p64 = por %p62, %p63
      %s66 = sadd.s32 %s65, 1
      %p69 = scmp.eq.s32.totalorder %s24, 3
      %p70 = scmp.ne.s32.totalorder %s65, %s67
      %p71 = scmp.eq.s32.totalorder %s24, 0
      %p72 = por %p70, %p71
      %p73 = scmp.ne.s32.totalorder %s65, %s67
      %p74 = scmp.eq.s32.totalorder %s29, 3
      %p75 = por %p73, %p74
      %p76 = scmp.ne.s32.totalorder %s67, %s68
      %p77 = scmp.eq.s32.totalorder %s29, 0
      %p78 = por %p76, %p77
      %p79 = scmp.ne.s32.totalorder %s67, %s68
      %p80 = scmp.eq.s32.totalorder %s30, 3
      %p81 = por %p79, %p80
      %p83 = scmp.ne.s32.totalorder %s68, %s82
      %p84 = scmp.eq.s32.totalorder %s30, 0
      %p85 = por %p83, %p84
      %s86 = ssub.s32 %s31, %s43
      %s87 = ssub.s32 %s32, %s39
      %s88 = sor.u32 %s86, %s87
      %p89 = scmp.eq.s32.totalorder %s88, 0
      %s91 = sadd.s32 %s90, 1
      %s92 = scalar_select %p89, %s90, %s91
      %p95 = pneg %p89
      %p96 = scmp.eq.s32.totalorder %s24, 3
      %p97 = por %p95, %p96
      %p98 = scmp.ne.s32.totalorder %s90, %s93
      %p99 = scmp.eq.s32.totalorder %s24, 0
      %p100 = por %p98, %p99
      %p101 = scmp.ne.s32.totalorder %s90, %s93
      %p102 = scmp.eq.s32.totalorder %s29, 3
      %p103 = por %p101, %p102
      %p104 = scmp.ne.s32.totalorder %s93, %s94
      %p105 = scmp.eq.s32.totalorder %s29, 0
      %p106 = por %p104, %p105
      %p107 = scmp.ne.s32.totalorder %s93, %s94
      %p108 = scmp.eq.s32.totalorder %s30, 3
      %p109 = por %p107, %p108
      %p111 = scmp.ne.s32.totalorder %s94, %s110
      %p112 = scmp.eq.s32.totalorder %s30, 0
      %p113 = por %p111, %p112
      %s115 = sadd.s32 %s114, 1
      %p118 = scmp.eq.s32.totalorder %s24, 3
      %p119 = scmp.ne.s32.totalorder %s114, %s116
      %p120 = scmp.eq.s32.totalorder %s24, 0
      %p121 = por %p119, %p120
      %p122 = scmp.ne.s32.totalorder %s114, %s116
      %p123 = scmp.eq.s32.totalorder %s29, 3
      %p124 = por %p122, %p123
      %p125 = scmp.ne.s32.totalorder %s116, %s117
      %p126 = scmp.eq.s32.totalorder %s29, 0
      %p127 = por %p125, %p126
      %p128 = scmp.ne.s32.totalorder %s116, %s117
      %p129 = scmp.eq.s32.totalorder %s30, 3
      %p130 = por %p128, %p129
      %p132 = scmp.ne.s32.totalorder %s117, %s131
      %p133 = scmp.eq.s32.totalorder %s30, 0
      %p134 = por %p132, %p133
      %s136 = sadd.s32 %s135, 1
      %p139 = scmp.eq.s32.totalorder %s24, 3
      %p140 = scmp.ne.s32.totalorder %s135, %s137
      %p141 = scmp.eq.s32.totalorder %s24, 0
      %p142 = por %p140, %p141
      %p143 = scmp.ne.s32.totalorder %s135, %s137
      %p144 = scmp.eq.s32.totalorder %s29, 3
      %p145 = por %p143, %p144
      %p146 = scmp.ne.s32.totalorder %s137, %s138
      %p147 = scmp.eq.s32.totalorder %s29, 0
      %p148 = por %p146, %p147
      %p149 = scmp.ne.s32.totalorder %s137, %s138
      %p150 = scmp.eq.s32.totalorder %s30, 3
      %p151 = por %p149, %p150
      %p153 = scmp.ne.s32.totalorder %s138, %s152
      %p154 = scmp.eq.s32.totalorder %s30, 0
      %p155 = por %p153, %p154
      %s157 = sadd.s32 %s156, 1
      %p160 = scmp.eq.s32.totalorder %s24, 3
      %p161 = scmp.ne.s32.totalorder %s156, %s158
      %p162 = scmp.eq.s32.totalorder %s24, 0
      %p163 = por %p161, %p162
      %p164 = scmp.ne.s32.totalorder %s156, %s158
      %p165 = scmp.eq.s32.totalorder %s29, 3
      %p166 = por %p164, %p165
      %p167 = scmp.ne.s32.totalorder %s158, %s159
      %p168 = scmp.eq.s32.totalorder %s29, 0
      %p169 = por %p167, %p168
      %p170 = scmp.ne.s32.totalorder %s158, %s159
      %p171 = scmp.eq.s32.totalorder %s30, 3
      %p172 = por %p170, %p171
      %p174 = scmp.ne.s32.totalorder %s159, %s173
      %p175 = scmp.eq.s32.totalorder %s30, 0
      %p176 = por %p174, %p175
      %s178 = sadd.s32 %s177, 1
      %p181 = scmp.eq.s32.totalorder %s24, 3
      %p182 = scmp.ne.s32.totalorder %s177, %s179
      %p183 = scmp.eq.s32.totalorder %s24, 0
      %p184 = por %p182, %p183
      %p185 = scmp.ne.s32.totalorder %s177, %s179
      %p186 = scmp.eq.s32.totalorder %s29, 3
      %p187 = por %p185, %p186
      %p188 = scmp.ne.s32.totalorder %s179, %s180
      %p189 = scmp.eq.s32.totalorder %s29, 0
      %p190 = por %p188, %p189
      %p191 = scmp.ne.s32.totalorder %s179, %s180
      %p192 = scmp.eq.s32.totalorder %s30, 3
      %p193 = por %p191, %p192
      %p195 = scmp.ne.s32.totalorder %s180, %s194
      %p196 = scmp.eq.s32.totalorder %s30, 0
      %p197 = por %p195, %p196
      %s199 = sadd.s32 %s198, 1
      %p202 = scmp.eq.s32.totalorder %s24, 3
      %p203 = scmp.ne.s32.totalorder %s198, %s200
      %p204 = scmp.eq.s32.totalorder %s24, 0
      %p205 = por %p203, %p204
      %p206 = scmp.ne.s32.totalorder %s198, %s200
      %p207 = scmp.eq.s32.totalorder %s29, 3
      %p208 = por %p206, %p207
      %p209 = scmp.ne.s32.totalorder %s200, %s201
      %p210 = scmp.eq.s32.totalorder %s29, 0
      %p211 = por %p209, %p210
      %p212 = scmp.ne.s32.totalorder %s200, %s201
      %p213 = scmp.eq.s32.totalorder %s30, 3
      %p214 = por %p212, %p213
      %p216 = scmp.ne.s32.totalorder %s201, %s215
      %p217 = scmp.eq.s32.totalorder %s30, 0
      %p218 = por %p216, %p217
      %s220 = sadd.s32 %s219, 1
      %p223 = scmp.eq.s32.totalorder %s24, 3
      %p224 = scmp.ne.s32.totalorder %s219, %s221
      %p225 = scmp.eq.s32.totalorder %s24, 0
      %p226 = por %p224, %p225
      %p227 = scmp.ne.s32.totalorder %s219, %s221
      %p228 = scmp.eq.s32.totalorder %s29, 3
      %p229 = por %p227, %p228
      %p230 = scmp.ne.s32.totalorder %s221, %s222
      %p231 = scmp.eq.s32.totalorder %s29, 0
      %p232 = por %p230, %p231
      %p233 = scmp.ne.s32.totalorder %s221, %s222
      %p234 = scmp.eq.s32.totalorder %s30, 3
      %p235 = por %p233, %p234
      %p237 = scmp.ne.s32.totalorder %s222, %s236
      %p238 = scmp.eq.s32.totalorder %s30, 0
      %p239 = por %p237, %p238
      %s240 = ssub.s32 %s31, %s43
      %p241 = scmp.eq.s32.totalorder %s240, 0
      %s243 = sadd.s32 %s242, 1
      %s244 = scalar_select %p241, %s242, %s243
      %p247 = pneg %p241
      %p248 = scmp.eq.s32.totalorder %s24, 3
      %p249 = por %p247, %p248
      %p250 = scmp.ne.s32.totalorder %s242, %s245
      %p251 = scmp.eq.s32.totalorder %s24, 0
      %p252 = por %p250, %p251
      %p253 = scmp.ne.s32.totalorder %s242, %s245
      %p254 = scmp.eq.s32.totalorder %s29, 3
      %p255 = por %p253, %p254
      %p256 = scmp.ne.s32.totalorder %s245, %s246
      %p257 = scmp.eq.s32.totalorder %s29, 0
      %p258 = por %p256, %p257
      %p259 = scmp.ne.s32.totalorder %s245, %s246
      %p260 = scmp.eq.s32.totalorder %s30, 3
      %p261 = por %p259, %p260
      %p263 = scmp.ne.s32.totalorder %s246, %s262
      %p264 = scmp.eq.s32.totalorder %s30, 0
      %p265 = por %p263, %p264
      %p266 = scmp.le.s32.totalorder 1, %s24
      %p267 = scmp.lt.s32.totalorder %s24, 5
      %p268 = pnand %p266, %p267
      %p269 = pneg %p268
      // Predicated region
      $region9: #{tpu_custom_call.1} parent=5 // pred_check
        _
      $region10: #{tpu_custom_call.1} parent=5 // pred_check_branch
        %271 = sbr.rel (%p268) target = $region12
      $region11: #{tpu_custom_call.1} parent=5 // pred_region
        %s272 = ssub.s32 %s24, 1
        // Predicated region
        $region13: #{tpu_custom_call.1} parent=11 // pred_check
          %p273 = pneg %p57
        $region14: #{tpu_custom_call.1} parent=11 // pred_check_branch
          %275 = sbr.rel (%p273) target = $region16
        $region15: #{tpu_custom_call.1} parent=11 // pred_region
          %s277 = ssub.s32 16, 16
          %278 = vsyncadd [#allocation8], %s277
          %s280 = sshll.u32 %s0, 4
          %s281 = int_to_ptr.vmem [resolvable:$true] %s280
          %283 = dma.vmem_to_smem %s281, 16, [#allocation5], [#allocation8]
        $region16: #{tpu_custom_call.1} parent=11 // pred_fallthru
          _
        // Predicated region
        $region17: #{tpu_custom_call.1} parent=11 // pred_check
          %p284 = pneg %p78
        $region18: #{tpu_custom_call.1} parent=11 // pred_check_branch
          %286 = sbr.rel (%p284) target = $region20
        $region19: #{tpu_custom_call.1} parent=11 // pred_region
          %s288 = ssub.s32 16, 16
          %289 = vsyncadd [#allocation10], %s288
          %s291 = sshll.u32 %s1, 4
          %s292 = int_to_ptr.vmem [resolvable:$true] %s291
          %294 = dma.vmem_to_smem %s292, 16, [#allocation9], [#allocation10]
        $region20: #{tpu_custom_call.1} parent=11 // pred_fallthru
          _
        // Predicated region
        $region21: #{tpu_custom_call.1} parent=11 // pred_check
          %p295 = pneg %p127
        $region22: #{tpu_custom_call.1} parent=11 // pred_check_branch
          %297 = sbr.rel (%p295) target = $region24
        $region23: #{tpu_custom_call.1} parent=11 // pred_region
          %s299 = ssub.s32 1024, 1024
          %300 = vsyncadd [#allocation13], %s299
          %s301 = sshll.u32 [#allocation12], 4
          %s302 = int_to_ptr.vmem [resolvable:$true] %s301
          %307 = dma.hbm_to_vmem [thread:$0]  %s3, 1024, %s302, [#allocation13], 128, 128, 8
        $region24: #{tpu_custom_call.1} parent=11 // pred_fallthru
          _
        // Predicated region
        $region25: #{tpu_custom_call.1} parent=11 // pred_check
          %p308 = pneg %p148
        $region26: #{tpu_custom_call.1} parent=11 // pred_check_branch
          %310 = sbr.rel (%p308) target = $region28
        $region27: #{tpu_custom_call.1} parent=11 // pred_region
          _
        $region28: #{tpu_custom_call.1} parent=11 // pred_fallthru
          _
        // Predicated region
        $region29: #{tpu_custom_call.1} parent=11 // pred_check
          %p311 = pneg %p169
        $region30: #{tpu_custom_call.1} parent=11 // pred_check_branch
          %313 = sbr.rel (%p311) target = $region32
        $region31: #{tpu_custom_call.1} parent=11 // pred_region
          %s315 = ssub.s32 1024, 1024
          %316 = vsyncadd [#allocation13], %s315
          %s317 = sshll.u32 [#allocation14], 4
          %s318 = int_to_ptr.vmem [resolvable:$true] %s317
          %323 = dma.hbm_to_vmem [thread:$0]  %s5, 1024, %s318, [#allocation13], 128, 128, 8
        $region32: #{tpu_custom_call.1} parent=11 // pred_fallthru
          _
        // Predicated region
        $region33: #{tpu_custom_call.1} parent=11 // pred_check
          %p324 = pneg %p190
        $region34: #{tpu_custom_call.1} parent=11 // pred_check_branch
          %326 = sbr.rel (%p324) target = $region36
        $region35: #{tpu_custom_call.1} parent=11 // pred_region
          _
        $region36: #{tpu_custom_call.1} parent=11 // pred_fallthru
          _
        // Predicated region
        $region37: #{tpu_custom_call.1} parent=11 // pred_check
          %p327 = pneg %p211
        $region38: #{tpu_custom_call.1} parent=11 // pred_check_branch
          %329 = sbr.rel (%p327) target = $region40
        $region39: #{tpu_custom_call.1} parent=11 // pred_region
          _
        $region40: #{tpu_custom_call.1} parent=11 // pred_fallthru
          _
        // Predicated region
        $region41: #{tpu_custom_call.1} parent=11 // pred_check
          %p330 = pneg %p232
        $region42: #{tpu_custom_call.1} parent=11 // pred_check_branch
          %332 = sbr.rel (%p330) target = $region44
        $region43: #{tpu_custom_call.1} parent=11 // pred_region
          _
        $region44: #{tpu_custom_call.1} parent=11 // pred_fallthru
          _
      $region12: #{tpu_custom_call.1} parent=5 // pred_fallthru
        _
      %p333 = scmp.lt.s32.totalorder %s24, 4
      // Predicated region
      $region45: #{tpu_custom_call.1} parent=5 // pred_check
        %p334 = pneg %p333
      $region46: #{tpu_custom_call.1} parent=5 // pred_check_branch
        %336 = sbr.rel (%p334) target = $region48
      $region47: #{tpu_custom_call.1} parent=5 // pred_region
        // Predicated region
        $region49: #{tpu_custom_call.1} parent=47 // pred_check
          %p337 = pneg %p100
        $region50: #{tpu_custom_call.1} parent=47 // pred_check_branch
          %339 = sbr.rel (%p337) target = $region52
        $region51: #{tpu_custom_call.1} parent=47 // pred_region
          #allocation17 [shape = 'u32[6]{0}', space=smem, size = 0x18, scoped, tag = 'DMA stride descriptor']
          %s340 = sand.u32 %s90, 1
          %s341 = scalar_lea.sflag [#allocation6], %s340
          %s342 = sand.u32 %s90, 1
          %s343 = smul.addr %s342, 32
          %s344 = scalar_lea.vmem [#allocation11], %s343
          %s345 = smul.u32 2, %s32
          %s347 = ssub.s32 512, 512
          %348 = vsyncadd %s341, %s347
          %s349 = smul.addr %s31, 16
          %s350 = sadd.s32 %s345, %s349
          %s351 = smul.addr %s350, 64
          %s352 = scalar_lea.hbm %s2, %s351
          %s354 = sshll.u32 1, 14
          %s355 = sxor.u32 4294967295, %s354
          %s357 = sld [smem:[#allocation0]]
          %s358 = sadd.s32 2, %s357
          %s360 = sshll.u32 7, 26
          %s361 = sxor.u32 4294967295, %s360
          %s362 = sand.u32 0, %s361
          %s363 = sshll.u32 %s358, 26
          %s364 = sor.u32 %s362, %s363
          %s365 = sshll.u32 %s344, 4
          %s366 = int_to_ptr.vmem [resolvable:$true] %s365
          %372 = sst [smem:[#allocation17]] 256
          %s373 = scalar_lea.smem [#allocation17], 1
          %374 = sst [smem:[%s373]] 128
          %s375 = scalar_lea.smem [#allocation17], 2
          %376 = sst [smem:[%s375]] 2
          %s377 = scalar_lea.smem [#allocation17], 3
          %378 = sst [smem:[%s377]] 64
          %s379 = scalar_lea.smem [#allocation17], 4
          %380 = sst [smem:[%s379]] 64
          %s381 = scalar_lea.smem [#allocation17], 5
          %382 = sst [smem:[%s381]] 4
          %384 = dma.general %s352, 512, %s366, %s341, [#allocation16], [#allocation17], %s364, 0
        $region52: #{tpu_custom_call.1} parent=47 // pred_fallthru
          _
      $region48: #{tpu_custom_call.1} parent=5 // pred_fallthru
        _
      %p385 = scmp.le.s32.totalorder 1, %s24
      %p386 = scmp.lt.s32.totalorder %s24, 5
      %p387 = pnand %p385, %p386
      %p388 = pneg %p387
      // Predicated region
      $region53: #{tpu_custom_call.1} parent=5 // pred_check
        _
      $region54: #{tpu_custom_call.1} parent=5 // pred_check_branch
        %390 = sbr.rel (%p387) target = $region56
      $region55: #{tpu_custom_call.1} parent=5 // pred_region
        %s391 = ssub.s32 %s24, 1
        // Predicated region
        $region57: #{tpu_custom_call.1} parent=55 // pred_check
          %p392 = pneg %p57
        $region58: #{tpu_custom_call.1} parent=55 // pred_check_branch
          %394 = sbr.rel (%p392) target = $region60
        $region59: #{tpu_custom_call.1} parent=55 // pred_region
          %395 = dma.done [#allocation8], 16
        $region60: #{tpu_custom_call.1} parent=55 // pred_fallthru
          _
        // Predicated region
        $region61: #{tpu_custom_call.1} parent=55 // pred_check
          %p396 = pneg %p78
        $region62: #{tpu_custom_call.1} parent=55 // pred_check_branch
          %398 = sbr.rel (%p396) target = $region64
        $region63: #{tpu_custom_call.1} parent=55 // pred_region
          %399 = dma.done [#allocation10], 16
        $region64: #{tpu_custom_call.1} parent=55 // pred_fallthru
          _
        %s400 = sand.u32 %s93, 1
        %s401 = scalar_lea.sflag [#allocation6], %s400
        %s402 = sand.u32 %s93, 1
        %s403 = smul.addr %s402, 32
        %s404 = scalar_lea.vmem [#allocation11], %s403
        // Predicated region
        $region65: #{tpu_custom_call.1} parent=55 // pred_check
          %p405 = pneg %p106
        $region66: #{tpu_custom_call.1} parent=55 // pred_check_branch
          %407 = sbr.rel (%p405) target = $region68
        $region67: #{tpu_custom_call.1} parent=55 // pred_region
          %408 = dma.done %s401, 512
        $region68: #{tpu_custom_call.1} parent=55 // pred_fallthru
          _
        // Predicated region
        $region69: #{tpu_custom_call.1} parent=55 // pred_check
          %p409 = pneg %p127
        $region70: #{tpu_custom_call.1} parent=55 // pred_check_branch
          %411 = sbr.rel (%p409) target = $region72
        $region71: #{tpu_custom_call.1} parent=55 // pred_region
          %412 = dma.done [#allocation13], 1024
        $region72: #{tpu_custom_call.1} parent=55 // pred_fallthru
          _
        // Predicated region
        $region73: #{tpu_custom_call.1} parent=55 // pred_check
          %p413 = pneg %p169
        $region74: #{tpu_custom_call.1} parent=55 // pred_check_branch
          %415 = sbr.rel (%p413) target = $region76
        $region75: #{tpu_custom_call.1} parent=55 // pred_region
          %416 = dma.done [#allocation13], 1024
        $region76: #{tpu_custom_call.1} parent=55 // pred_fallthru
          _
        %417 = sfence
        %p418 = pneg %p57
        %p419 = pneg %p54
        %p420 = pneg %p78
        %p421 = pneg %p75
        %s422 = sand.u32 %s93, 1
        %s423 = scalar_lea.sflag [#allocation6], %s422
        %s424 = sand.u32 %s93, 1
        %s425 = smul.addr %s424, 32
        %s426 = scalar_lea.vmem [#allocation11], %s425
        %p427 = pneg %p106
        %p428 = pneg %p103
        %p429 = pneg %p127
        %p430 = pneg %p124
        %p431 = pneg %p148
        %p432 = pneg %p145
        %p433 = pneg %p169
        %p434 = pneg %p166
        %p435 = pneg %p190
        %p436 = pneg %p187
        %p437 = pneg %p211
        %p438 = pneg %p208
        %p439 = pneg %p232
        %p440 = pneg %p229
        %p441 = pneg %p258
        %p442 = pneg %p255
        %s443 = sand.u32 %s245, 1
        %s444 = scalar_lea.sflag [#allocation7], %s443
        %s445 = sand.u32 %s245, 1
        %s446 = smul.addr %s445, 4
        %s447 = scalar_lea.vmem [#allocation15], %s446
        %s448 = smul.u32 2, %s34
        %v449 = vld [vmem:[%s404] sm:$0xf]
        %v450 = vld [vmem:[%s404 + $0x4] sm:$0xf]
        %v451 = vunpack.c.l.bf16 %v449
        %v452 = vunpack.c.l.bf16 %v450
        %s453 = sld [smem:[#allocation5]]
        %v454 = vstv %s453
        %v455 = vmul.f32 %v454, %v451
        %v456 = vmul.f32 %v454, %v452
        %s457 = sld [smem:[#allocation9]]
        %v458 = vstv %s457
        %v459 = vmul.f32 %v458, %v451
        %v460 = vmul.f32 %v458, %v452
        %s461 = scalar_lea.vmem %s404, 8 [#allocation11]
        %v462 = vld [vmem:[%s461] sm:$0xf]
        %v463 = vld [vmem:[%s461 + $0x4] sm:$0xf]
        %v464 = vunpack.c.l.bf16 %v462
        %v465 = vunpack.c.l.bf16 %v463
        %s466 = sld [smem:[#allocation5 + $0x1]]
        %v467 = vstv %s466
        %v468 = vmul.f32 %v467, %v464
        %v469 = vmul.f32 %v467, %v465
        %v470 = vadd.f32 %v455, %v468
        %v471 = vadd.f32 %v456, %v469
        %s472 = sld [smem:[#allocation9 + $0x1]]
        %v473 = vstv %s472
        %v474 = vmul.f32 %v473, %v464
        %v475 = vmul.f32 %v473, %v465
        %v476 = vadd.f32 %v459, %v474
        %v477 = vadd.f32 %v460, %v475
        %s478 = scalar_lea.vmem %s404, 16 [#allocation11]
        %v479 = vld [vmem:[%s478] sm:$0xf]
        %v480 = vld [vmem:[%s478 + $0x4] sm:$0xf]
        %v481 = vunpack.c.l.bf16 %v479
        %v482 = vunpack.c.l.bf16 %v480
        %s483 = sld [smem:[#allocation5 + $0x2]]
        %v484 = vstv %s483
        %v485 = vmul.f32 %v484, %v481
        %v486 = vmul.f32 %v484, %v482
        %v487 = vadd.f32 %v470, %v485
        %v488 = vadd.f32 %v471, %v486
        %s489 = sld [smem:[#allocation9 + $0x2]]
        %v490 = vstv %s489
        %v491 = vmul.f32 %v490, %v481
        %v492 = vmul.f32 %v490, %v482
        %v493 = vadd.f32 %v476, %v491
        %v494 = vadd.f32 %v477, %v492
        %s495 = scalar_lea.vmem %s404, 24 [#allocation11]
        %v496 = vld [vmem:[%s495] sm:$0xf]
        %v497 = vld [vmem:[%s495 + $0x4] sm:$0xf]
        %v498 = vunpack.c.l.bf16 %v496
        %v499 = vunpack.c.l.bf16 %v497
        %s500 = sld [smem:[#allocation5 + $0x3]]
        %v501 = vstv %s500
        %v502 = vmul.f32 %v501, %v498
        %v503 = vmul.f32 %v501, %v499
        %v504 = vadd.f32 %v487, %v502
        %v505 = vadd.f32 %v488, %v503
        %s506 = sld [smem:[#allocation9 + $0x3]]
        %v507 = vstv %s506
        %v508 = vmul.f32 %v507, %v498
        %v509 = vmul.f32 %v507, %v499
        %v510 = vadd.f32 %v493, %v508
        %v511 = vadd.f32 %v494, %v509
        %v512 = vld [vmem:[#allocation12] sm:$0xff]
        %v513 = vld [vmem:[#allocation12 + $0x8] sm:$0xff]
        %v514 = vld [vmem:[#allocation12 + $0x10] sm:$0xff]
        %v515 = vld [vmem:[#allocation12 + $0x18] sm:$0xff]
        %v516 = vld [vmem:[#allocation12 + $0x20] sm:$0xff]
        %v517 = vld [vmem:[#allocation12 + $0x28] sm:$0xff]
        %v518 = vld [vmem:[#allocation12 + $0x30] sm:$0xff]
        %v519 = vld [vmem:[#allocation12 + $0x38] sm:$0xff]
        %v520 = vld [vmem:[%s4] sm:$0x1]
        %v522 = vlaneseq
        %v523 = vshrl.u32 %v522, 7
        %v524 = vsub.s32 0, %v523
        %v525 = vrot.slane %v520, %v524
        %vm527 = vcmask 523264
        %v529 = vsel %vm527, %v504, 0
        %v532 = vsel %vm527, %v505, 0
        %534 = vmatprep.subr.mxu0 0.0
        %535 = vmatpush1.msra.mxu0 %v512
        %536 = vmatprep.subr.mxu0 0.0
        %537 = vmatpush1.msra.mxu0 %v513
        %538 = vmatprep.subr.mxu0 0.0
        %539 = vmatpush1.msra.mxu0 %v514
        %540 = vmatprep.subr.mxu0 0.0
        %541 = vmatpush1.msra.mxu0 %v515
        %542 = vmatprep.subr.mxu0 0.0
        %543 = vmatpush1.msra.mxu0 %v516
        %544 = vmatprep.subr.mxu0 0.0
        %545 = vmatpush1.msra.mxu0 %v517
        %546 = vmatprep.subr.mxu0 0.0
        %547 = vmatpush1.msra.mxu0 %v518
        %548 = vmatprep.subr.mxu0 0.0
        %549 = vmatpush1.msra.mxu0 %v519
        %550 = vmatprep.subr.mxu0 0.0
        %551 = vmatpush1.msra.mxu0 0.0
        %552 = vmatprep.subr.mxu0 0.0
        %553 = vmatpush1.msra.mxu0 0.0
        %554 = vmatprep.subr.mxu0 0.0
        %555 = vmatpush1.msra.mxu0 0.0
        %556 = vmatprep.subr.mxu0 0.0
        %557 = vmatpush1.msra.mxu0 0.0
        %558 = vmatprep.subr.mxu0 0.0
        %559 = vmatpush1.msra.mxu0 0.0
        %560 = vmatprep.subr.mxu0 0.0
        %561 = vmatpush1.msra.mxu0 0.0
        %562 = vmatprep.subr.mxu0 0.0
        %563 = vmatpush1.msra.mxu0 0.0
        %564 = vmatprep.subr.mxu0 0.0
        %565 = vmatpush1.msra.mxu0 0.0
        %566 = vmatprep.subr.mxu0 0.0
        %567 = vmatpush1.msra.mxu0 0.0
        %568 = vmatprep.subr.mxu0 0.0
        %569 = vmatpush1.msra.mxu0 0.0
        %570 = vmatprep.subr.mxu0 0.0
        %571 = vmatpush1.msra.mxu0 0.0
        %572 = vmatprep.subr.mxu0 0.0
        %573 = vmatpush1.msra.mxu0 0.0
        %574 = vmatprep.subr.mxu0 0.0
        %575 = vmatpush1.msra.mxu0 0.0
        %576 = vmatprep.subr.mxu0 0.0
        %577 = vmatpush1.msra.mxu0 0.0
        %578 = vmatprep.subr.mxu0 0.0
        %579 = vmatpush1.msra.mxu0 0.0
        %580 = vmatprep.subr.mxu0 0.0
        %581 = vmatpush1.msra.mxu0 0.0
        %582 = vmatprep.subr.mxu0 0.0
        %583 = vmatpush1.msra.mxu0 0.0
        %584 = vmatprep.subr.mxu0 0.0
        %585 = vmatpush1.msra.mxu0 0.0
        %586 = vmatprep.subr.mxu0 0.0
        %587 = vmatpush1.msra.mxu0 0.0
        %588 = vmatprep.subr.mxu0 0.0
        %589 = vmatpush1.msra.mxu0 0.0
        %590 = vmatprep.subr.mxu0 0.0
        %591 = vmatpush1.msra.mxu0 0.0
        %592 = vmatprep.subr.mxu0 0.0
        %593 = vmatpush1.msra.mxu0 0.0
        %594 = vmatprep.subr.mxu0 0.0
        %595 = vmatpush1.msra.mxu0 0.0
        %596 = vmatprep.subr.mxu0 0.0
        %597 = vmatpush1.msra.mxu0 0.0
        %598 = vmatprep.mubr.f32.mxu0 0.0
        %599 = vmatmul.mubr.f32.gmra.mrb[0].mxu0 %v529
        %v600 = vpop.f32.mrb[0].mxu0
        %v601 = vadd.f32 %v525, %v600
        %v602 = vpop.f32.mrb[0].mxu0
        %603 = vmatprep.mubr.f32.mxu0 0.0
        %604 = vmatmul.mubr.f32.gmra.mrb[0].mxu0 %v532
        %v605 = vpop.f32.mrb[0].mxu0
        %v606 = vadd.f32 %v525, %v605
        %v607 = vpop.f32.mrb[0].mxu0
        %608 = vdwg.mxu0
        %v609 = vld [vmem:[#allocation14] sm:$0xff]
        %v610 = vld [vmem:[#allocation14 + $0x8] sm:$0xff]
        %v611 = vld [vmem:[#allocation14 + $0x10] sm:$0xff]
        %v612 = vld [vmem:[#allocation14 + $0x18] sm:$0xff]
        %v613 = vld [vmem:[#allocation14 + $0x20] sm:$0xff]
        %v614 = vld [vmem:[#allocation14 + $0x28] sm:$0xff]
        %v615 = vld [vmem:[#allocation14 + $0x30] sm:$0xff]
        %v616 = vld [vmem:[#allocation14 + $0x38] sm:$0xff]
        %v617 = vld [vmem:[%s6] sm:$0x1]
        %v619 = vlaneseq
        %v620 = vshrl.u32 %v619, 7
        %v621 = vsub.s32 0, %v620
        %v622 = vrot.slane %v617, %v621
        %v625 = vsel %vm527, %v510, 0
        %v628 = vsel %vm527, %v511, 0
        %630 = vmatprep.subr.mxu0 0.0
        %631 = vmatpush1.msra.mxu0 %v609
        %632 = vmatprep.subr.mxu0 0.0
        %633 = vmatpush1.msra.mxu0 %v610
        %634 = vmatprep.subr.mxu0 0.0
        %635 = vmatpush1.msra.mxu0 %v611
        %636 = vmatprep.subr.mxu0 0.0
        %637 = vmatpush1.msra.mxu0 %v612
        %638 = vmatprep.subr.mxu0 0.0
        %639 = vmatpush1.msra.mxu0 %v613
        %640 = vmatprep.subr.mxu0 0.0
        %641 = vmatpush1.msra.mxu0 %v614
        %642 = vmatprep.subr.mxu0 0.0
        %643 = vmatpush1.msra.mxu0 %v615
        %644 = vmatprep.subr.mxu0 0.0
        %645 = vmatpush1.msra.mxu0 %v616
        %646 = vmatprep.subr.mxu0 0.0
        %647 = vmatpush1.msra.mxu0 0.0
        %648 = vmatprep.subr.mxu0 0.0
        %649 = vmatpush1.msra.mxu0 0.0
        %650 = vmatprep.subr.mxu0 0.0
        %651 = vmatpush1.msra.mxu0 0.0
        %652 = vmatprep.subr.mxu0 0.0
        %653 = vmatpush1.msra.mxu0 0.0
        %654 = vmatprep.subr.mxu0 0.0
        %655 = vmatpush1.msra.mxu0 0.0
        %656 = vmatprep.subr.mxu0 0.0
        %657 = vmatpush1.msra.mxu0 0.0
        %658 = vmatprep.subr.mxu0 0.0
        %659 = vmatpush1.msra.mxu0 0.0
        %660 = vmatprep.subr.mxu0 0.0
        %661 = vmatpush1.msra.mxu0 0.0
        %662 = vmatprep.subr.mxu0 0.0
        %663 = vmatpush1.msra.mxu0 0.0
        %664 = vmatprep.subr.mxu0 0.0
        %665 = vmatpush1.msra.mxu0 0.0
        %666 = vmatprep.subr.mxu0 0.0
        %667 = vmatpush1.msra.mxu0 0.0
        %668 = vmatprep.subr.mxu0 0.0
        %669 = vmatpush1.msra.mxu0 0.0
        %670 = vmatprep.subr.mxu0 0.0
        %671 = vmatpush1.msra.mxu0 0.0
        %672 = vmatprep.subr.mxu0 0.0
        %673 = vmatpush1.msra.mxu0 0.0
        %674 = vmatprep.subr.mxu0 0.0
        %675 = vmatpush1.msra.mxu0 0.0
        %676 = vmatprep.subr.mxu0 0.0
        %677 = vmatpush1.msra.mxu0 0.0
        %678 = vmatprep.subr.mxu0 0.0
        %679 = vmatpush1.msra.mxu0 0.0
        %680 = vmatprep.subr.mxu0 0.0
        %681 = vmatpush1.msra.mxu0 0.0
        %682 = vmatprep.subr.mxu0 0.0
        %683 = vmatpush1.msra.mxu0 0.0
        %684 = vmatprep.subr.mxu0 0.0
        %685 = vmatpush1.msra.mxu0 0.0
        %686 = vmatprep.subr.mxu0 0.0
        %687 = vmatpush1.msra.mxu0 0.0
        %688 = vmatprep.subr.mxu0 0.0
        %689 = vmatpush1.msra.mxu0 0.0
        %690 = vmatprep.subr.mxu0 0.0
        %691 = vmatpush1.msra.mxu0 0.0
        %692 = vmatprep.subr.mxu0 0.0
        %693 = vmatpush1.msra.mxu0 0.0
        %694 = vmatprep.mubr.f32.mxu0 0.0
        %695 = vmatmul.mubr.f32.gmra.mrb[0].mxu0 %v625
        %v696 = vpop.f32.mrb[0].mxu0
        %v697 = vadd.f32 %v622, %v696
        %v698 = vpop.f32.mrb[0].mxu0
        %699 = vmatprep.mubr.f32.mxu0 0.0
        %700 = vmatmul.mubr.f32.gmra.mrb[0].mxu0 %v628
        %v701 = vpop.f32.mrb[0].mxu0
        %v702 = vadd.f32 %v622, %v701
        %v703 = vpop.f32.mrb[0].mxu0
        %704 = vdwg.mxu0
        %v705 = vld [vmem:[%s7] sm:$0xf]
        %v706 = vld [vmem:[%s8] sm:$0xf]
        %708 = vset.pattern.permute.xlu0 0
        %709 = vperm.xlu0 %708, %v706
        %v710 = vpop.permute.xlu0 %709
        %712 = vmatprep.subr.mxu0 0.0
        %713 = vmatpush1.xpose.msra.mxu0 %v601
        %714 = vmatprep.subr.mxu0 0.0
        %715 = vmatpush1.xpose.msra.mxu0 %v606
        %716 = vmatprep.subr.mxu0 0.0
        %717 = vmatpush1.xpose.msra.mxu0 0.0
        %718 = vmatprep.subr.mxu0 0.0
        %719 = vmatpush1.xpose.msra.mxu0 0.0
        %720 = vmatprep.subr.mxu0 0.0
        %721 = vmatpush1.xpose.msra.mxu0 0.0
        %722 = vmatprep.subr.mxu0 0.0
        %723 = vmatpush1.xpose.msra.mxu0 0.0
        %724 = vmatprep.subr.mxu0 0.0
        %725 = vmatpush1.xpose.msra.mxu0 0.0
        %726 = vmatprep.subr.mxu0 0.0
        %727 = vmatpush1.xpose.msra.mxu0 0.0
        %728 = vmatprep.subr.mxu0 0.0
        %729 = vmatpush1.xpose.msra.mxu0 0.0
        %730 = vmatprep.subr.mxu0 0.0
        %731 = vmatpush1.xpose.msra.mxu0 0.0
        %732 = vmatprep.subr.mxu0 0.0
        %733 = vmatpush1.xpose.msra.mxu0 0.0
        %734 = vmatprep.subr.mxu0 0.0
        %735 = vmatpush1.xpose.msra.mxu0 0.0
        %736 = vmatprep.subr.mxu0 0.0
        %737 = vmatpush1.xpose.msra.mxu0 0.0
        %738 = vmatprep.subr.mxu0 0.0
        %739 = vmatpush1.xpose.msra.mxu0 0.0
        %740 = vmatprep.subr.mxu0 0.0
        %741 = vmatpush1.xpose.msra.mxu0 0.0
        %742 = vmatprep.subr.mxu0 0.0
        %743 = vmatpush1.xpose.msra.mxu0 0.0
        %744 = vmatprep.subr.mxu0 0.0
        %745 = vmatpush1.xpose.msra.mxu0 0.0
        %746 = vmatprep.subr.mxu0 0.0
        %747 = vmatpush1.xpose.msra.mxu0 0.0
        %748 = vmatprep.subr.mxu0 0.0
        %749 = vmatpush1.xpose.msra.mxu0 0.0
        %750 = vmatprep.subr.mxu0 0.0
        %751 = vmatpush1.xpose.msra.mxu0 0.0
        %752 = vmatprep.subr.mxu0 0.0
        %753 = vmatpush1.xpose.msra.mxu0 0.0
        %754 = vmatprep.subr.mxu0 0.0
        %755 = vmatpush1.xpose.msra.mxu0 0.0
        %756 = vmatprep.subr.mxu0 0.0
        %757 = vmatpush1.xpose.msra.mxu0 0.0
        %758 = vmatprep.subr.mxu0 0.0
        %759 = vmatpush1.xpose.msra.mxu0 0.0
        %760 = vmatprep.subr.mxu0 0.0
        %761 = vmatpush1.xpose.msra.mxu0 0.0
        %762 = vmatprep.subr.mxu0 0.0
        %763 = vmatpush1.xpose.msra.mxu0 0.0
        %764 = vmatprep.subr.mxu0 0.0
        %765 = vmatpush1.xpose.msra.mxu0 0.0
        %766 = vmatprep.subr.mxu0 0.0
        %767 = vmatpush1.xpose.msra.mxu0 0.0
        %768 = vmatprep.subr.mxu0 0.0
        %769 = vmatpush1.xpose.msra.mxu0 0.0
        %770 = vmatprep.subr.mxu0 0.0
        %771 = vmatpush1.xpose.msra.mxu0 0.0
        %772 = vmatprep.subr.mxu0 0.0
        %773 = vmatpush1.xpose.msra.mxu0 0.0
        %774 = vmatprep.subr.mxu0 0.0
        %775 = vmatpush1.xpose.msra.mxu0 0.0
        %776 = vmatprep.mubr.f32.mxu0 0.0
        %777 = vmatmul.mubr.f32.gmra.mrb[0].mxu0 %v705
        %v778 = vpop.f32.mrb[0].mxu0
        %v779 = vadd.f32 %v710, %v778
        %v780 = vpop.f32.mrb[0].mxu0
        %781 = vdwg.mxu0
        %p782 = scmp.eq.s32.totalorder %s34, 0
        // Predicated region
        $region77: #{tpu_custom_call.1} parent=55 // pred_check
          %p783 = pneg %p782
        $region78: #{tpu_custom_call.1} parent=55 // pred_check_branch
          %785 = sbr.rel (%p783) target = $region80
        $region79: #{tpu_custom_call.1} parent=55 // pred_region
          %vm786 = vcmask 3072
          %787 = vst.msk [vmem:[#allocation2] sm:$0xf] %vm786, -1e+30
          %788 = vst.msk [vmem:[#allocation3] sm:$0xf] %vm786, 0.0
          %789 = vst [vmem:[#allocation4] sm:$0xf] 0.0
        $region80: #{tpu_custom_call.1} parent=55 // pred_fallthru
          _
        %s790 = smul.u32 %s34, 16
        %v791 = vlaneseq
        %v792 = vand.u32 %v791, 127
        %v793 = vstv %s790
        %v794 = vadd.s32 %v793, %v792
        %vm795 = vcmp.lt.s32.totalorder %v794, 28
        %v796 = vsel %vm795, 1, 0
        %vm797 = vcmp.eq.s32.totalorder %v796, 1
        %v798 = vsel %vm797, %v779, -1e+30
        %v799 = vld [vmem:[#allocation2] sm:$0xf]
        %vm800 = vcmask 125952
        %v801 = vsel %vm800, %v798, -inf
        %802 = vmax.xlane.f32.xlu0 %v801
        %v803 = vpop.xlane.xlu0 %802
        %v804 = vmax.f32 %v799, %v803
        %v805 = vsub.f32 %v799, %v804
        %v806 = vmul.f32 %v805, 1.442695
        %v807 = vpow.pop %v806
        %809 = vset.pattern.permute.xlu0 0
        %810 = vperm.xlu0 %809, %v804
        %v811 = vpop.permute.xlu0 %810
        %v813 = vsub.f32 %v798, %v811
        %v814 = vmul.f32 %v813, 1.442695
        %v815 = vpow.pop %v814
        %v816 = vld [vmem:[#allocation3] sm:$0xf]
        %v817 = vmul.f32 %v807, %v816
        %v818 = vsel %vm800, %v815, 0.0
        %819 = vadd.xlane.f32.xlu0 %v818
        %v820 = vpop.xlane.xlu0 %819
        %v821 = vadd.f32 %v817, %v820
        %vm822 = vcmask 3072
        %823 = vst.msk [vmem:[#allocation3] sm:$0xf] %vm822, %v821
        %v824 = vld [vmem:[#allocation4] sm:$0xf]
        %826 = vset.pattern.permute.xlu0 0
        %827 = vperm.xlu0 %826, %v807
        %v828 = vpop.permute.xlu0 %827
        %v830 = vmul.f32 %v828, %v824
        %vm831 = vcmask 130048
        %v833 = vsel %vm831, %v815, 0
        %835 = vmatprep.subr.mxu0 0.0
        %836 = vmatpush1.msra.mxu0 %v697
        %837 = vmatprep.subr.mxu0 0.0
        %838 = vmatpush1.msra.mxu0 %v702
        %839 = vmatprep.subr.mxu0 0.0
        %840 = vmatpush1.msra.mxu0 0.0
        %841 = vmatprep.subr.mxu0 0.0
        %842 = vmatpush1.msra.mxu0 0.0
        %843 = vmatprep.subr.mxu0 0.0
        %844 = vmatpush1.msra.mxu0 0.0
        %845 = vmatprep.subr.mxu0 0.0
        %846 = vmatpush1.msra.mxu0 0.0
        %847 = vmatprep.subr.mxu0 0.0
        %848 = vmatpush1.msra.mxu0 0.0
        %849 = vmatprep.subr.mxu0 0.0
        %850 = vmatpush1.msra.mxu0 0.0
        %851 = vmatprep.subr.mxu0 0.0
        %852 = vmatpush1.msra.mxu0 0.0
        %853 = vmatprep.subr.mxu0 0.0
        %854 = vmatpush1.msra.mxu0 0.0
        %855 = vmatprep.subr.mxu0 0.0
        %856 = vmatpush1.msra.mxu0 0.0
        %857 = vmatprep.subr.mxu0 0.0
        %858 = vmatpush1.msra.mxu0 0.0
        %859 = vmatprep.subr.mxu0 0.0
        %860 = vmatpush1.msra.mxu0 0.0
        %861 = vmatprep.subr.mxu0 0.0
        %862 = vmatpush1.msra.mxu0 0.0
        %863 = vmatprep.subr.mxu0 0.0
        %864 = vmatpush1.msra.mxu0 0.0
        %865 = vmatprep.subr.mxu0 0.0
        %866 = vmatpush1.msra.mxu0 0.0
        %867 = vmatprep.subr.mxu0 0.0
        %868 = vmatpush1.msra.mxu0 0.0
        %869 = vmatprep.subr.mxu0 0.0
        %870 = vmatpush1.msra.mxu0 0.0
        %871 = vmatprep.subr.mxu0 0.0
        %872 = vmatpush1.msra.mxu0 0.0
        %873 = vmatprep.subr.mxu0 0.0
        %874 = vmatpush1.msra.mxu0 0.0
        %875 = vmatprep.subr.mxu0 0.0
        %876 = vmatpush1.msra.mxu0 0.0
        %877 = vmatprep.subr.mxu0 0.0
        %878 = vmatpush1.msra.mxu0 0.0
        %879 = vmatprep.subr.mxu0 0.0
        %880 = vmatpush1.msra.mxu0 0.0
        %881 = vmatprep.subr.mxu0 0.0
        %882 = vmatpush1.msra.mxu0 0.0
        %883 = vmatprep.subr.mxu0 0.0
        %884 = vmatpush1.msra.mxu0 0.0
        %885 = vmatprep.subr.mxu0 0.0
        %886 = vmatpush1.msra.mxu0 0.0
        %887 = vmatprep.subr.mxu0 0.0
        %888 = vmatpush1.msra.mxu0 0.0
        %889 = vmatprep.subr.mxu0 0.0
        %890 = vmatpush1.msra.mxu0 0.0
        %891 = vmatprep.subr.mxu0 0.0
        %892 = vmatpush1.msra.mxu0 0.0
        %893 = vmatprep.subr.mxu0 0.0
        %894 = vmatpush1.msra.mxu0 0.0
        %895 = vmatprep.subr.mxu0 0.0
        %896 = vmatpush1.msra.mxu0 0.0
        %897 = vmatprep.subr.mxu0 0.0
        %898 = vmatpush1.msra.mxu0 0.0
        %899 = vmatprep.mubr.f32.mxu0 0.0
        %900 = vmatmul.mubr.f32.gmra.mrb[0].mxu0 %v833
        %v901 = vpop.f32.mrb[0].mxu0
        %v902 = vadd.f32 0.0, %v901
        %v903 = vpop.f32.mrb[0].mxu0
        %904 = vdwg.mxu0
        %v905 = vadd.f32 %v830, %v902
        %906 = vst [vmem:[#allocation4] sm:$0xf] %v905
        %907 = vst.msk [vmem:[#allocation2] sm:$0xf] %vm822, %v804
        %p908 = scmp.eq.s32.totalorder %s34, 1
        // Predicated region
        $region81: #{tpu_custom_call.1} parent=55 // pred_check
          %p909 = pneg %p908
        $region82: #{tpu_custom_call.1} parent=55 // pred_check_branch
          %911 = sbr.rel (%p909) target = $region84
        $region83: #{tpu_custom_call.1} parent=55 // pred_region
          %v912 = vld [vmem:[#allocation3] sm:$0xf]
          %v913 = vrcp.pop %v912
          %v914 = vld [vmem:[#allocation4] sm:$0xf]
          %916 = vset.pattern.permute.xlu0 0
          %917 = vperm.xlu0 %916, %v913
          %v918 = vpop.permute.xlu0 %917
          %v920 = vmul.f32 %v914, %v918
          %921 = vst [vmem:[%s447] sm:$0xf] %v920
        $region84: #{tpu_custom_call.1} parent=55 // pred_fallthru
          _
        %s922 = sand.u32 %s245, 1
        %s923 = scalar_lea.sflag [#allocation7], %s922
        %s924 = sand.u32 %s245, 1
        %s925 = smul.addr %s924, 4
        %s926 = scalar_lea.vmem [#allocation15], %s925
        // Predicated region
        $region85: #{tpu_custom_call.1} parent=55 // pred_check
          %p927 = pneg %p255
        $region86: #{tpu_custom_call.1} parent=55 // pred_check_branch
          %929 = sbr.rel (%p927) target = $region88
        $region87: #{tpu_custom_call.1} parent=55 // pred_region
          %s931 = ssub.s32 64, 64
          %932 = vsyncadd %s923, %s931
          %s933 = smul.addr %s33, 64
          %s934 = scalar_lea.hbm %s9, %s933
          %s936 = sshll.u32 %s926, 4
          %s937 = int_to_ptr.vmem [resolvable:$true] %s936
          %939 = dma.vmem_to_hbm [thread:$0]  %s937, 64, %s934, %s923
        $region88: #{tpu_custom_call.1} parent=55 // pred_fallthru
          _
      $region56: #{tpu_custom_call.1} parent=5 // pred_fallthru
        _
      %p940 = scmp.le.s32.totalorder 2, %s24
      // Predicated region
      $region89: #{tpu_custom_call.1} parent=5 // pred_check
        %p941 = pneg %p940
      $region90: #{tpu_custom_call.1} parent=5 // pred_check_branch
        %943 = sbr.rel (%p941) target = $region92
      $region91: #{tpu_custom_call.1} parent=5 // pred_region
        %s944 = ssub.s32 %s24, 2
        // Predicated region
        $region93: #{tpu_custom_call.1} parent=91 // pred_check
          %p945 = pneg %p261
        $region94: #{tpu_custom_call.1} parent=91 // pred_check_branch
          %947 = sbr.rel (%p945) target = $region96
        $region95: #{tpu_custom_call.1} parent=91 // pred_region
          %s948 = sand.u32 %s246, 1
          %s949 = scalar_lea.sflag [#allocation7], %s948
          %s950 = sand.u32 %s246, 1
          %s951 = smul.addr %s950, 4
          %s952 = scalar_lea.vmem [#allocation15], %s951
          %953 = dma.done %s949, 64
        $region96: #{tpu_custom_call.1} parent=91 // pred_fallthru
          _
      $region92: #{tpu_custom_call.1} parent=5 // pred_fallthru
        _
    $region6: #{tpu_custom_call.1} parent=1 // loop_footer
      %s28 = sadd.s32 1, %s24
    $region7: #{tpu_custom_call.1} parent=1 // loop_footer_branch
      %23 = sbr.rel target = $region3
    $region8: #{tpu_custom_call.1} parent=1 // loop_exit
      _
    %954 = vsyncpa [#allocation6], 1
    %s955 = scalar_lea.sflag [#allocation6], 1
    %956 = vsyncpa %s955, 1
    %957 = vsyncpa [#allocation13], 1
    %958 = vsyncpa [#allocation7], 1
    %s959 = scalar_lea.sflag [#allocation7], 1
    %960 = vsyncpa %s959, 1
    %961 = vsyncpa [#allocation8], 1
    %s962 = scalar_lea.sflag [#allocation8], 1
    %963 = vsyncpa %s962, 1
    %964 = vsyncpa [#allocation10], 1

</llo_original>
